<compile_context>
chip_gen: v5e
topology: v5e:2x2
jax: 0.10.0
libtpu: 0.0.40
codegen_flags: <defaults>
</compile_context>

<pallas_src>
import jax
import jax.numpy as jnp
from jax.experimental import pallas as pl
from jax.experimental.pallas import tpu as pltpu


def _hbm_copy_kernel(x_hbm_ref, o_hbm_ref, sem):
    # Direct HBM -> HBM DMA of the whole array.  No VMEM staging, no
    # VMEM->vreg->VMEM pass, no grid: the DMA engine does all the work.
    cp = pltpu.make_async_copy(x_hbm_ref, o_hbm_ref, sem)
    cp.start()
    cp.wait()


def pallas_device_copy(x: jax.Array) -> jax.Array:
    """Fresh-buffer copy of `x` on the same device via one HBM->HBM DMA."""
    if x.size == 0:
        return x
    return pl.pallas_call(
        _hbm_copy_kernel,
        out_shape=jax.ShapeDtypeStruct(x.shape, x.dtype),
        in_specs=[pl.BlockSpec(memory_space=pl.ANY)],
        out_specs=pl.BlockSpec(memory_space=pl.ANY),
        scratch_shapes=[pltpu.SemaphoreType.DMA(())],
        cost_estimate=pl.CostEstimate(
            flops=0,
            transcendentals=0,
            bytes_accessed=2 * x.size * x.dtype.itemsize,
        ),
    )(x)


class DataToDevice:
    """JAX/Pallas port of the PyTorch DataToDevice module."""

    def __init__(self, device=None):
        self.device = device

    def _to_device(self, e, copy: bool):
        # Non-tensor arguments pass through (matches `type(e) == torch.Tensor`).
        if not isinstance(e, jax.Array):
            return e
        on_target = self.device is None or self.device in e.devices()
        if not on_target:
            # TODO(synk): cross-device / host transfer has no single-kernel
            # Pallas equivalent; it is host-orchestrated via jax.device_put.
            return jax.device_put(e, self.device)
        if copy:
            # torch's `.to(device, copy=True)`: fresh buffer on the same
            # device -> one direct HBM->HBM DMA Pallas kernel.
            return pallas_device_copy(e)
        # Already on the target device: `.to(device)` is the identity (same
        # buffer, zero data movement) -- exactly torch's behavior.
        return e

    def __call__(self, *args, copy: bool = False):
        ret = tuple(self._to_device(e, copy) for e in args)
        if len(ret) == 1:
            return ret[0]
        return ret


def data_to_device(*args):
    """Functional form matching DataToDevice(device=default).forward(*args)."""
    return DataToDevice(jax.devices()[0])(*args)


if __name__ == "__main__":
    key = jax.random.PRNGKey(0)
    k1, k2, k3 = jax.random.split(key, 3)

    # Small deterministic example inputs consistent with the module (an NCHW
    # image batch, a small feature tensor, a non-tensor python object), plus
    # one 4 MiB batch that exercises the HBM->HBM DMA copy path meaningfully.
    x = jax.random.normal(k1, (2, 4, 16, 16), dtype=jnp.float32)
    y = jax.random.normal(k2, (8, 32), dtype=jnp.bfloat16)
    meta = {"tag": "not_a_tensor"}
    z = jax.random.normal(k3, (64, 4, 64, 64), dtype=jnp.float32)

    mod = DataToDevice(jax.devices()[0])

    # Multi-arg case -> tuple; default `.to(device)` semantics (identity when
    # the array is already on the target device, exactly like torch).
    out_x, out_y, out_meta, out_z = mod(x, y, meta, z)
    jax.block_until_ready((out_x, out_y, out_z))

    # Single-arg case -> unwrapped.
    out_single = mod(z)
    jax.block_until_ready(out_single)

    # Explicit fresh-buffer copies: exercises the Pallas HBM->HBM DMA kernel.
    cx, cy, cmeta, cz = mod(x, y, meta, z, copy=True)
    jax.block_until_ready((cx, cy, cz))

    # Correctness checks.
    assert out_meta is meta and cmeta is meta
    assert out_x is x and out_y is y and out_z is z          # identity on-device
    assert out_single is z
    for got, ref in ((cx, x), (cy, y), (cz, z)):
        assert got.shape == ref.shape and got.dtype == ref.dtype
        assert bool(jnp.all(got == ref))

    print("KERNEL_OK")
</pallas_src>

<mosaic_0001>
module attributes {stable_mosaic.version = 11 : i64} {
  func.func @_hbm_copy_kernel(%arg0: memref<2x4x16x16xf32, #tpu.memory_space<any>>, %arg1: memref<2x4x16x16xf32, #tpu.memory_space<any>>, %arg2: memref<!tpu.dma_semaphore, #tpu.memory_space<semaphore_mem>>) attributes {dimension_semantics = [], scalar_prefetch = 0 : i64, scratch_operands = 1 : i64, tpu.core_type = #tpu.core_type<tc>} {
    tpu.enqueue_dma source(%arg0 : memref<2x4x16x16xf32, #tpu.memory_space<any>>) target(%arg1 : memref<2x4x16x16xf32, #tpu.memory_space<any>>) target_semaphore(%arg2 : memref<!tpu.dma_semaphore, #tpu.memory_space<semaphore_mem>>)
    tpu.wait_dma2 semaphore(%arg2 : memref<!tpu.dma_semaphore, #tpu.memory_space<semaphore_mem>>) src(%arg0 : memref<2x4x16x16xf32, #tpu.memory_space<any>>) dst(%arg1 : memref<2x4x16x16xf32, #tpu.memory_space<any>>)
    return
  }
}

</mosaic_0001>

<llo_original>
// kernel: tpu_custom_call.1
$region0: #{tpu_custom_call.1}
  #allocation0 [shape = 'u32[]', space=smem, size = 0x4, offset = 0x4, fixed_abs, tag = 'smem constant byte address 0x4 - core index']
  #allocation1 [shape = 'u32[72,128]{1,0:T(1,128)}', space=vmem, size = 0x9000, scoped, tag = 'internal scratch']
  #allocation2 [shape = 's32[1]{0}', space=sflag, size = 0x4, scoped, tag = 'scratch operand']
  #allocation3 [shape = 's32[]', space=sflag, size = 0x4, offset = 0, fixed_abs, tag = 'sflag constant byte address 0x0 - dummy sync flag']
  #allocation4 [shape = 'u32[0]{0}', space=smem, size = 0, offset = 0, fixed_abs, tag = 'smem constant byte address 0x0 - null']
  %s0 = inlined_call_operand.hbm [shape: f32[2,4,16,16], index: 0, kind: input, shape index: {}]
  %s1 = inlined_call_operand.hbm [shape: f32[2,4,16,16], index: 1, kind: output, shape index: {}]
  %s2 = sld [smem:[#allocation0]]
  $region2: #{tpu_custom_call.1} parent=0
    _
  %s4 = ssub.s32 1, %s2
  %s5 = scalar_select 0, %s4, %s2
  %s7 = sshll.u32 1, 14
  %s8 = sxor.u32 4294967295, %s7
  %s10 = sshll.u32 %s0, 4
  %s11 = int_to_ptr.hbm [resolvable:$true] %s10
  %s12 = sshll.u32 %s1, 4
  %s13 = int_to_ptr.hbm [resolvable:$true] %s12
  %16 = dma.general %s11, 2048, %s13, [#allocation2], [#allocation3], [#allocation4], 0, 0
  %s17 = smul.u32 2, 4
  %s18 = smul.u32 %s17, 16
  %s19 = smul.u32 %s18, 1
  %s20 = sshll.u32 %s19, 4
  %21 = dma.done [#allocation2], %s20
  %22 = vsyncmov [#allocation2]
  %s23 = vpop.sfrf %22
  %p24 = scmp.eq.s32.totalorder %s23, 0
  %p25 = pneg %p24
  %27 = shalt.err (%p25)

</llo_original>
